<compile_context>
chip_gen: v5e
topology: v5e:2x2
jax: 0.10.0
libtpu: 0.0.40
codegen_flags: <defaults>
</compile_context>

<pallas_src>
import functools
import math

import jax
import jax.numpy as jnp
from jax.experimental import pallas as pl
from jax.experimental.pallas import tpu as pltpu

BN_EPS = 1e-5


# ----------------------------- Pallas kernel --------------------------------

def _res_graphconv_kernel(x_ref,
                          w01a_ref, diag_a_ref, off_a_ref, shift_a_ref,
                          w01b_ref, diag_b_ref, off_b_ref, shift_b_ref,
                          o_ref, *, fh, fo):
    """Fused _ResGraphConv on the batch-merged (B*N, F) activation block."""
    x = x_ref[...]                                           # (M, F) f32

    def gconv_bn_relu(inp, w01_ref, diag_ref, off_ref, shift_ref, fout):
        # SemGraphConv with bias + eval-BN folded into (W01, shift):
        #   h = x @ [W0'|W1'] ; y = diag*h0 + off_blockdiag @ h1 + shift ; relu
        xb = inp.astype(jnp.bfloat16)
        h = jnp.dot(xb, w01_ref[...],                        # (M, 2*fout), one MXU pass
                    preferred_element_type=jnp.float32)
        h0 = h[:, :fout]                                     # lane-aligned slices
        h1 = h[:, fout:]
        y = (diag_ref[...] * h0                              # (M,fout) VPU mul
             + jnp.dot(off_ref[...],                         # (M,M)@(M,fout) MXU (bf16)
                       h1.astype(jnp.bfloat16),
                       preferred_element_type=jnp.float32)
             + shift_ref[...])                               # folded bias + BN shift
        return jnp.maximum(y, 0.0)                           # ReLU (f32 VPU)

    y = gconv_bn_relu(x, w01a_ref, diag_a_ref, off_a_ref, shift_a_ref, fh)
    y = gconv_bn_relu(y, w01b_ref, diag_b_ref, off_b_ref, shift_b_ref, fo)
    o_ref[...] = x + y                                       # residual add (f32)


def res_graphconv(x, p1, p2):
    """Fused _ResGraphConv forward.  x: (B, N, F) float32."""
    B, N, F = x.shape
    Fh = p1["shift"].shape[1]                 # hid_dim
    Fo = p2["shift"].shape[1]                 # output_dim (== F for residual add)
    assert Fo == F, "residual add requires input_dim == output_dim"
    M = B * N

    xm = x.reshape(M, F)                      # fold batch into the matmul M dim

    # Advisory cost estimate (tiny kernel; helps XLA overlap the launch).
    flops = 2 * M * F * (2 * Fh) + 2 * M * M * Fh \
        + 2 * M * Fh * (2 * Fo) + 2 * M * M * Fo
    operands = (xm, p1["W01"], p1["diag"], p1["off"], p1["shift"],
                p2["W01"], p2["diag"], p2["off"], p2["shift"])
    bytes_accessed = int(sum(int(a.size) * a.dtype.itemsize for a in operands)
                         + M * F * 4)

    kernel = functools.partial(_res_graphconv_kernel, fh=Fh, fo=Fo)
    out = pl.pallas_call(
        kernel,
        out_shape=jax.ShapeDtypeStruct((M, F), jnp.float32),
        cost_estimate=pl.CostEstimate(flops=flops, transcendentals=0,
                                      bytes_accessed=bytes_accessed),
    )(*operands)
    return out.reshape(B, N, F)


# --------------------------- parameter construction -------------------------

def init_graphconv(key, adj, in_f, out_f, batch):
    """Synthetic init mirroring SemGraphConv.__init__ + BatchNorm1d (eval),
    with everything static precomputed / folded for the fused kernel."""
    kw, kb = jax.random.split(key)

    # SemGraphConv parameters.
    gain = 1.414
    bound = gain * math.sqrt(6.0 / (in_f + out_f))           # xavier_uniform
    W = jax.random.uniform(kw, (2, in_f, out_f), jnp.float32, -bound, bound)
    stdv = 1.0 / math.sqrt(out_f)
    bias = jax.random.uniform(kb, (1, out_f), jnp.float32, -stdv, stdv)

    # Masked-softmax adjacency (torch: adj[m] = e (=1); softmax(dim=1)),
    # precomputed once and split into diagonal / off-diagonal parts.
    mask = adj > 0
    logits = jnp.where(mask, 1.0, -9e15).astype(jnp.float32)
    adj_sm = jax.nn.softmax(logits, axis=1)                  # (N, N)
    n = adj.shape[0]
    eye = jnp.eye(n, dtype=jnp.float32)
    diag = jnp.sum(adj_sm * eye, axis=1, keepdims=True)      # (N, 1)
    off = adj_sm * (1.0 - eye)                               # (N, N)

    # BatchNorm1d eval-mode (fresh running stats) folded into weights + shift.
    bn_scale = 1.0 / math.sqrt(1.0 + BN_EPS)
    bn_shift = 0.0

    # W0|W1 concatenated -> one 2*out_f-wide matmul per layer (fills MXU cols).
    W01 = (jnp.concatenate([W[0], W[1]], axis=1) * bn_scale).astype(jnp.bfloat16)
    shift = (bias * bn_scale + bn_shift).astype(jnp.float32)          # (1, out_f)

    # Pre-broadcast diag across lanes and tile across the merged batch dim,
    # and build a block-diagonal off-adjacency for the batch-merged matmul.
    diag_b = jnp.tile(jnp.broadcast_to(diag, (n, out_f)), (batch, 1))  # (B*N, out_f) f32
    off_bd = jnp.kron(jnp.eye(batch, dtype=jnp.float32), off).astype(jnp.bfloat16)

    return {"W01": W01, "diag": diag_b, "off": off_bd, "shift": shift}


def _chain_adjacency(n):
    i = jnp.arange(n)
    return (jnp.abs(i[:, None] - i[None, :]) <= 1).astype(jnp.float32)


# ---------------------------------- main -------------------------------------

if __name__ == "__main__":
    # _ResGraphConv(adj, input_dim, output_dim, hid_dim): residual add forces
    # input_dim == output_dim.  Feature dims are lane-aligned (128).
    B, N = 2, 16                      # batch, graph nodes (e.g. skeleton joints)
    in_dim = out_dim = 128
    hid_dim = 128

    key = jax.random.PRNGKey(0)
    k1, k2, kx = jax.random.split(key, 3)

    adj = _chain_adjacency(N)         # synthetic adjacency (chain + self loops)
    p_gconv1 = init_graphconv(k1, adj, in_dim, hid_dim, batch=B)
    p_gconv2 = init_graphconv(k2, adj, hid_dim, out_dim, batch=B)

    x = jax.random.normal(kx, (B, N, in_dim), jnp.float32)

    out = jax.block_until_ready(res_graphconv(x, p_gconv1, p_gconv2))
    assert out.shape == (B, N, out_dim), out.shape
    print("KERNEL_OK")
</pallas_src>

<mosaic_0001>
module attributes {stable_mosaic.version = 11 : i64} {
  func.func @_res_graphconv_kernel(%arg0: memref<32x128xf32, #tpu.memory_space<vmem>>, %arg1: memref<128x256xbf16, #tpu.memory_space<vmem>>, %arg2: memref<32x128xf32, #tpu.memory_space<vmem>>, %arg3: memref<32x32xbf16, #tpu.memory_space<vmem>>, %arg4: memref<1x128xf32, #tpu.memory_space<vmem>>, %arg5: memref<128x256xbf16, #tpu.memory_space<vmem>>, %arg6: memref<32x128xf32, #tpu.memory_space<vmem>>, %arg7: memref<32x32xbf16, #tpu.memory_space<vmem>>, %arg8: memref<1x128xf32, #tpu.memory_space<vmem>>, %arg9: memref<32x128xf32, #tpu.memory_space<vmem>>) attributes {dimension_semantics = [], scalar_prefetch = 0 : i64, scratch_operands = 0 : i64, tpu.core_type = #tpu.core_type<tc>} {
    %c0 = arith.constant 0 : index
    %c0_0 = arith.constant 0 : index
    %0 = vector.load %arg0[%c0, %c0_0] : memref<32x128xf32, #tpu.memory_space<vmem>>, vector<32x128xf32>
    %1 = arith.truncf %0 : vector<32x128xf32> to vector<32x128xbf16>
    %c0_1 = arith.constant 0 : index
    %c0_2 = arith.constant 0 : index
    %2 = vector.load %arg1[%c0_1, %c0_2] : memref<128x256xbf16, #tpu.memory_space<vmem>>, vector<128x256xbf16>
    %cst = arith.constant dense<0.000000e+00> : vector<32x256xf32>
    %3 = tpu.matmul %1, %2, %cst {dimension_numbers = #tpu.dot_dimension_numbers<[1], [0], [0], [1], [0, 0, 1, 1], [], []>} : vector<32x128xbf16>, vector<128x256xbf16>, vector<32x256xf32> -> vector<32x256xf32>
    %4 = vector.extract_strided_slice %3 {offsets = [0, 0], sizes = [32, 128], strides = [1, 1]} : vector<32x256xf32> to vector<32x128xf32>
    %5 = vector.extract_strided_slice %3 {offsets = [0, 128], sizes = [32, 128], strides = [1, 1]} : vector<32x256xf32> to vector<32x128xf32>
    %c0_3 = arith.constant 0 : index
    %c0_4 = arith.constant 0 : index
    %6 = vector.load %arg2[%c0_3, %c0_4] : memref<32x128xf32, #tpu.memory_space<vmem>>, vector<32x128xf32>
    %7 = arith.mulf %6, %4 : vector<32x128xf32>
    %c0_5 = arith.constant 0 : index
    %c0_6 = arith.constant 0 : index
    %8 = vector.load %arg3[%c0_5, %c0_6] : memref<32x32xbf16, #tpu.memory_space<vmem>>, vector<32x32xbf16>
    %9 = arith.truncf %5 : vector<32x128xf32> to vector<32x128xbf16>
    %cst_7 = arith.constant dense<0.000000e+00> : vector<32x128xf32>
    %10 = tpu.matmul %8, %9, %cst_7 {dimension_numbers = #tpu.dot_dimension_numbers<[1], [0], [0], [1], [0, 0, 1, 1], [], []>} : vector<32x32xbf16>, vector<32x128xbf16>, vector<32x128xf32> -> vector<32x128xf32>
    %11 = arith.addf %7, %10 : vector<32x128xf32>
    %c0_8 = arith.constant 0 : index
    %c0_9 = arith.constant 0 : index
    %12 = vector.load %arg4[%c0_8, %c0_9] : memref<1x128xf32, #tpu.memory_space<vmem>>, vector<1x128xf32>
    %13 = vector.broadcast %12 : vector<1x128xf32> to vector<32x128xf32>
    %14 = arith.addf %11, %13 : vector<32x128xf32>
    %cst_10 = arith.constant 0.000000e+00 : f32
    %15 = vector.broadcast %cst_10 : f32 to vector<32x128xf32>
    %16 = arith.maximumf %14, %15 : vector<32x128xf32>
    %17 = arith.truncf %16 : vector<32x128xf32> to vector<32x128xbf16>
    %c0_11 = arith.constant 0 : index
    %c0_12 = arith.constant 0 : index
    %18 = vector.load %arg5[%c0_11, %c0_12] : memref<128x256xbf16, #tpu.memory_space<vmem>>, vector<128x256xbf16>
    %cst_13 = arith.constant dense<0.000000e+00> : vector<32x256xf32>
    %19 = tpu.matmul %17, %18, %cst_13 {dimension_numbers = #tpu.dot_dimension_numbers<[1], [0], [0], [1], [0, 0, 1, 1], [], []>} : vector<32x128xbf16>, vector<128x256xbf16>, vector<32x256xf32> -> vector<32x256xf32>
    %20 = vector.extract_strided_slice %19 {offsets = [0, 0], sizes = [32, 128], strides = [1, 1]} : vector<32x256xf32> to vector<32x128xf32>
    %21 = vector.extract_strided_slice %19 {offsets = [0, 128], sizes = [32, 128], strides = [1, 1]} : vector<32x256xf32> to vector<32x128xf32>
    %c0_14 = arith.constant 0 : index
    %c0_15 = arith.constant 0 : index
    %22 = vector.load %arg6[%c0_14, %c0_15] : memref<32x128xf32, #tpu.memory_space<vmem>>, vector<32x128xf32>
    %23 = arith.mulf %22, %20 : vector<32x128xf32>
    %c0_16 = arith.constant 0 : index
    %c0_17 = arith.constant 0 : index
    %24 = vector.load %arg7[%c0_16, %c0_17] : memref<32x32xbf16, #tpu.memory_space<vmem>>, vector<32x32xbf16>
    %25 = arith.truncf %21 : vector<32x128xf32> to vector<32x128xbf16>
    %cst_18 = arith.constant dense<0.000000e+00> : vector<32x128xf32>
    %26 = tpu.matmul %24, %25, %cst_18 {dimension_numbers = #tpu.dot_dimension_numbers<[1], [0], [0], [1], [0, 0, 1, 1], [], []>} : vector<32x32xbf16>, vector<32x128xbf16>, vector<32x128xf32> -> vector<32x128xf32>
    %27 = arith.addf %23, %26 : vector<32x128xf32>
    %c0_19 = arith.constant 0 : index
    %c0_20 = arith.constant 0 : index
    %28 = vector.load %arg8[%c0_19, %c0_20] : memref<1x128xf32, #tpu.memory_space<vmem>>, vector<1x128xf32>
    %29 = vector.broadcast %28 : vector<1x128xf32> to vector<32x128xf32>
    %30 = arith.addf %27, %29 : vector<32x128xf32>
    %cst_21 = arith.constant 0.000000e+00 : f32
    %31 = vector.broadcast %cst_21 : f32 to vector<32x128xf32>
    %32 = arith.maximumf %30, %31 : vector<32x128xf32>
    %33 = arith.addf %0, %32 : vector<32x128xf32>
    %c0_22 = arith.constant 0 : index
    %c0_23 = arith.constant 0 : index
    %34 = vector.load %arg9[%c0_22, %c0_23] : memref<32x128xf32, #tpu.memory_space<vmem>>, vector<32x128xf32>
    tpu.vector_store %arg9[%c0_22, %c0_23], %33 {strides = array<i32>} : memref<32x128xf32, #tpu.memory_space<vmem>>, vector<32x128xf32>,
    return
  }
}

</mosaic_0001>

<llo_original>
// kernel: tpu_custom_call.1
$region0: #{tpu_custom_call.1}
  #allocation0 [shape = 'u32[]', space=smem, size = 0x4, offset = 0x4, fixed_abs, tag = 'smem constant byte address 0x4 - core index']
  #allocation1 [shape = 'u32[72,128]{1,0:T(1,128)}', space=vmem, size = 0x9000, scoped, tag = 'internal scratch']
  %s0 = inlined_call_operand.hbm [shape: f32[32,128], index: 0, kind: input, shape index: {}]
  %s1 = inlined_call_operand.hbm [shape: bf16[128,256], index: 1, kind: input, shape index: {}]
  %s2 = inlined_call_operand.hbm [shape: f32[32,128], index: 2, kind: input, shape index: {}]
  %s3 = inlined_call_operand.hbm [shape: bf16[32,32], index: 3, kind: input, shape index: {}]
  %s4 = inlined_call_operand.vmem [shape: f32[1,128], index: 4, kind: input, shape index: {}]
  %s5 = inlined_call_operand.hbm [shape: bf16[128,256], index: 5, kind: input, shape index: {}]
  %s6 = inlined_call_operand.hbm [shape: f32[32,128], index: 6, kind: input, shape index: {}]
  %s7 = inlined_call_operand.hbm [shape: bf16[32,32], index: 7, kind: input, shape index: {}]
  %s8 = inlined_call_operand.vmem [shape: f32[1,128], index: 8, kind: input, shape index: {}]
  %s9 = inlined_call_operand.hbm [shape: f32[32,128], index: 9, kind: output, shape index: {}]
  %s10 = sld [smem:[#allocation0]]
  $region74: #{tpu_custom_call.1} parent=0
    _
  %s12 = ssub.s32 1, %s10
  %s13 = scalar_select 0, %s12, %s10
  $region1: #{tpu_custom_call.1} parent=0
    #allocation2 [shape = 'u8[16384]{0}', space=vmem, size = 0x4000, scoped, tag = 'input window, operand 0, single buffered']
    #allocation3 [shape = 's32[1]{0}', space=sflag, size = 0x4, scoped, tag = 'scoped memory for tpu_custom_call.1']
    #allocation4 [shape = 's32[1]{0}', space=sflag, size = 0x4, scoped, tag = 'scoped memory for tpu_custom_call.1']
    #allocation5 [shape = 'u8[65536]{0}', space=vmem, size = 0x10000, scoped, tag = 'input window, operand 1, single buffered']
    #allocation6 [shape = 's32[1]{0}', space=sflag, size = 0x4, scoped, tag = 'scoped memory for tpu_custom_call.1']
    #allocation7 [shape = 'u8[16384]{0}', space=vmem, size = 0x4000, scoped, tag = 'input window, operand 2, single buffered']
    #allocation8 [shape = 'u8[8192]{0}', space=vmem, size = 0x2000, scoped, tag = 'input window, operand 3, single buffered']
    #allocation9 [shape = 's32[1]{0}', space=sflag, size = 0x4, scoped, tag = 'scoped memory for tpu_custom_call.1']
    #allocation10 [shape = 'u8[65536]{0}', space=vmem, size = 0x10000, scoped, tag = 'input window, operand 5, single buffered']
    #allocation11 [shape = 'u8[16384]{0}', space=vmem, size = 0x4000, scoped, tag = 'input window, operand 6, single buffered']
    #allocation12 [shape = 's32[1]{0}', space=sflag, size = 0x4, scoped, tag = 'scoped memory for tpu_custom_call.1']
    #allocation13 [shape = 'u8[8192]{0}', space=vmem, size = 0x2000, scoped, tag = 'input window, operand 7, single buffered']
    #allocation14 [shape = 'u8[16384]{0}', space=vmem, size = 0x4000, scoped, tag = 'output window, operand 0, single buffered']
    %14 = vsyncpa [#allocation3], 0
    %15 = vsyncpa [#allocation6], 0
    %16 = vsyncpa [#allocation9], 0
    %17 = vsyncpa [#allocation12], 0
    %18 = vsyncpa [#allocation4], 0
    // Predicated region
    $region2: #{tpu_custom_call.1} parent=1 // pred_check
      _
    $region3: #{tpu_custom_call.1} parent=1 // pred_check_branch
      %20 = sbr.rel (0) target = $region5
    $region4: #{tpu_custom_call.1} parent=1 // pred_region
      %22 = vsyncadd [#allocation3], 0
      %s23 = sshll.u32 %s0, 4
      %s24 = int_to_ptr.hbm [resolvable:$true] %s23
      %s25 = sshll.u32 [#allocation2], 4
      %s26 = int_to_ptr.vmem [resolvable:$true] %s25
      %31 = dma.hbm_to_vmem [thread:$0]  %s24, 512, %s26, [#allocation3], 128, 128, 8
    $region5: #{tpu_custom_call.1} parent=1 // pred_fallthru
      _
    // Predicated region
    $region6: #{tpu_custom_call.1} parent=1 // pred_check
      _
    $region7: #{tpu_custom_call.1} parent=1 // pred_check_branch
      %33 = sbr.rel (0) target = $region9
    $region8: #{tpu_custom_call.1} parent=1 // pred_region
      %35 = vsyncadd [#allocation6], 0
      %s36 = sshll.u32 %s1, 4
      %s37 = int_to_ptr.hbm [resolvable:$true] %s36
      %s38 = sshll.u32 [#allocation5], 4
      %s39 = int_to_ptr.vmem [resolvable:$true] %s38
      %44 = dma.hbm_to_vmem [thread:$0]  %s37, 2048, %s39, [#allocation6], 128, 128, 8
    $region9: #{tpu_custom_call.1} parent=1 // pred_fallthru
      _
    // Predicated region
    $region10: #{tpu_custom_call.1} parent=1 // pred_check
      _
    $region11: #{tpu_custom_call.1} parent=1 // pred_check_branch
      %46 = sbr.rel (0) target = $region13
    $region12: #{tpu_custom_call.1} parent=1 // pred_region
      %48 = vsyncadd [#allocation6], 0
      %s49 = sshll.u32 %s2, 4
      %s50 = int_to_ptr.hbm [resolvable:$true] %s49
      %s51 = sshll.u32 [#allocation7], 4
      %s52 = int_to_ptr.vmem [resolvable:$true] %s51
      %57 = dma.hbm_to_vmem [thread:$0]  %s50, 512, %s52, [#allocation6], 128, 128, 8
    $region13: #{tpu_custom_call.1} parent=1 // pred_fallthru
      _
    // Predicated region
    $region14: #{tpu_custom_call.1} parent=1 // pred_check
      _
    $region15: #{tpu_custom_call.1} parent=1 // pred_check_branch
      %59 = sbr.rel (0) target = $region17
    $region16: #{tpu_custom_call.1} parent=1 // pred_region
      %61 = vsyncadd [#allocation9], 0
      %s62 = sshll.u32 %s3, 4
      %s63 = int_to_ptr.hbm [resolvable:$true] %s62
      %s64 = sshll.u32 [#allocation8], 4
      %s65 = int_to_ptr.vmem [resolvable:$true] %s64
      %70 = dma.hbm_to_vmem [thread:$0]  %s63, 256, %s65, [#allocation9], 64, 64, 4
    $region17: #{tpu_custom_call.1} parent=1 // pred_fallthru
      _
    // Predicated region
    $region18: #{tpu_custom_call.1} parent=1 // pred_check
      _
    $region19: #{tpu_custom_call.1} parent=1 // pred_check_branch
      %72 = sbr.rel (0) target = $region21
    $region20: #{tpu_custom_call.1} parent=1 // pred_region
      _
    $region21: #{tpu_custom_call.1} parent=1 // pred_fallthru
      _
    // Predicated region
    $region22: #{tpu_custom_call.1} parent=1 // pred_check
      _
    $region23: #{tpu_custom_call.1} parent=1 // pred_check_branch
      %74 = sbr.rel (0) target = $region25
    $region24: #{tpu_custom_call.1} parent=1 // pred_region
      %76 = vsyncadd [#allocation9], 0
      %s77 = sshll.u32 %s5, 4
      %s78 = int_to_ptr.hbm [resolvable:$true] %s77
      %s79 = sshll.u32 [#allocation10], 4
      %s80 = int_to_ptr.vmem [resolvable:$true] %s79
      %85 = dma.hbm_to_vmem [thread:$0]  %s78, 2048, %s80, [#allocation9], 128, 128, 8
    $region25: #{tpu_custom_call.1} parent=1 // pred_fallthru
      _
    // Predicated region
    $region26: #{tpu_custom_call.1} parent=1 // pred_check
      _
    $region27: #{tpu_custom_call.1} parent=1 // pred_check_branch
      %87 = sbr.rel (0) target = $region29
    $region28: #{tpu_custom_call.1} parent=1 // pred_region
      %89 = vsyncadd [#allocation12], 0
      %s90 = sshll.u32 %s6, 4
      %s91 = int_to_ptr.hbm [resolvable:$true] %s90
      %s92 = sshll.u32 [#allocation11], 4
      %s93 = int_to_ptr.vmem [resolvable:$true] %s92
      %98 = dma.hbm_to_vmem [thread:$0]  %s91, 512, %s93, [#allocation12], 128, 128, 8
    $region29: #{tpu_custom_call.1} parent=1 // pred_fallthru
      _
    // Predicated region
    $region30: #{tpu_custom_call.1} parent=1 // pred_check
      _
    $region31: #{tpu_custom_call.1} parent=1 // pred_check_branch
      %100 = sbr.rel (0) target = $region33
    $region32: #{tpu_custom_call.1} parent=1 // pred_region
      %102 = vsyncadd [#allocation12], 0
      %s103 = sshll.u32 %s7, 4
      %s104 = int_to_ptr.hbm [resolvable:$true] %s103
      %s105 = sshll.u32 [#allocation13], 4
      %s106 = int_to_ptr.vmem [resolvable:$true] %s105
      %111 = dma.hbm_to_vmem [thread:$0]  %s104, 256, %s106, [#allocation12], 64, 64, 4
    $region33: #{tpu_custom_call.1} parent=1 // pred_fallthru
      _
    // Predicated region
    $region34: #{tpu_custom_call.1} parent=1 // pred_check
      _
    $region35: #{tpu_custom_call.1} parent=1 // pred_check_branch
      %113 = sbr.rel (0) target = $region37
    $region36: #{tpu_custom_call.1} parent=1 // pred_region
      _
    $region37: #{tpu_custom_call.1} parent=1 // pred_fallthru
      _
    // Predicated region
    $region38: #{tpu_custom_call.1} parent=1 // pred_check
      _
    $region39: #{tpu_custom_call.1} parent=1 // pred_check_branch
      %115 = sbr.rel (0) target = $region41
    $region40: #{tpu_custom_call.1} parent=1 // pred_region
      %117 = dma.done [#allocation3], 512
    $region41: #{tpu_custom_call.1} parent=1 // pred_fallthru
      _
    // Predicated region
    $region42: #{tpu_custom_call.1} parent=1 // pred_check
      _
    $region43: #{tpu_custom_call.1} parent=1 // pred_check_branch
      %119 = sbr.rel (0) target = $region45
    $region44: #{tpu_custom_call.1} parent=1 // pred_region
      %121 = dma.done [#allocation6], 2048
    $region45: #{tpu_custom_call.1} parent=1 // pred_fallthru
      _
    // Predicated region
    $region46: #{tpu_custom_call.1} parent=1 // pred_check
      _
    $region47: #{tpu_custom_call.1} parent=1 // pred_check_branch
      %123 = sbr.rel (0) target = $region49
    $region48: #{tpu_custom_call.1} parent=1 // pred_region
      %125 = dma.done [#allocation6], 512
    $region49: #{tpu_custom_call.1} parent=1 // pred_fallthru
      _
    // Predicated region
    $region50: #{tpu_custom_call.1} parent=1 // pred_check
      _
    $region51: #{tpu_custom_call.1} parent=1 // pred_check_branch
      %127 = sbr.rel (0) target = $region53
    $region52: #{tpu_custom_call.1} parent=1 // pred_region
      %129 = dma.done [#allocation9], 256
    $region53: #{tpu_custom_call.1} parent=1 // pred_fallthru
      _
    // Predicated region
    $region54: #{tpu_custom_call.1} parent=1 // pred_check
      _
    $region55: #{tpu_custom_call.1} parent=1 // pred_check_branch
      %131 = sbr.rel (0) target = $region57
    $region56: #{tpu_custom_call.1} parent=1 // pred_region
      %133 = dma.done [#allocation9], 2048
    $region57: #{tpu_custom_call.1} parent=1 // pred_fallthru
      _
    // Predicated region
    $region58: #{tpu_custom_call.1} parent=1 // pred_check
      _
    $region59: #{tpu_custom_call.1} parent=1 // pred_check_branch
      %135 = sbr.rel (0) target = $region61
    $region60: #{tpu_custom_call.1} parent=1 // pred_region
      %137 = dma.done [#allocation12], 512
    $region61: #{tpu_custom_call.1} parent=1 // pred_fallthru
      _
    // Predicated region
    $region62: #{tpu_custom_call.1} parent=1 // pred_check
      _
    $region63: #{tpu_custom_call.1} parent=1 // pred_check_branch
      %139 = sbr.rel (0) target = $region65
    $region64: #{tpu_custom_call.1} parent=1 // pred_region
      %141 = dma.done [#allocation12], 256
    $region65: #{tpu_custom_call.1} parent=1 // pred_fallthru
      _
    %v143 = vld [vmem:[#allocation2] sm:$0xff]
    %v144 = vld [vmem:[#allocation2 + $0x8] sm:$0xff]
    %v145 = vld [vmem:[#allocation2 + $0x10] sm:$0xff]
    %v146 = vld [vmem:[#allocation2 + $0x18] sm:$0xff]
    %v147 = vpack.c.bf16 %v144, %v143
    %v148 = vpack.c.bf16 %v146, %v145
    %v149 = vld [vmem:[#allocation5] sm:$0xff]
    %v150 = vld [vmem:[#allocation5 + $0x8] sm:$0xff]
    %v151 = vld [vmem:[#allocation5 + $0x10] sm:$0xff]
    %v152 = vld [vmem:[#allocation5 + $0x18] sm:$0xff]
    %v153 = vld [vmem:[#allocation5 + $0x20] sm:$0xff]
    %v154 = vld [vmem:[#allocation5 + $0x28] sm:$0xff]
    %v155 = vld [vmem:[#allocation5 + $0x30] sm:$0xff]
    %v156 = vld [vmem:[#allocation5 + $0x38] sm:$0xff]
    %v157 = vld [vmem:[#allocation5 + $0x40] sm:$0xff]
    %v158 = vld [vmem:[#allocation5 + $0x48] sm:$0xff]
    %v159 = vld [vmem:[#allocation5 + $0x50] sm:$0xff]
    %v160 = vld [vmem:[#allocation5 + $0x58] sm:$0xff]
    %v161 = vld [vmem:[#allocation5 + $0x60] sm:$0xff]
    %v162 = vld [vmem:[#allocation5 + $0x68] sm:$0xff]
    %v163 = vld [vmem:[#allocation5 + $0x70] sm:$0xff]
    %v164 = vld [vmem:[#allocation5 + $0x78] sm:$0xff]
    %v181 = vunpack.c.l.b16 %v149
    %v182 = vunpack.c.h.b16 %v149
    %v183 = vunpack.c.l.b16 %v150
    %v184 = vunpack.c.h.b16 %v150
    %v185 = vunpack.c.l.b16 %v151
    %v186 = vunpack.c.h.b16 %v151
    %v187 = vunpack.c.l.b16 %v152
    %v188 = vunpack.c.h.b16 %v152
    %v189 = vunpack.c.l.b16 %v153
    %v190 = vunpack.c.h.b16 %v153
    %v191 = vunpack.c.l.b16 %v154
    %v192 = vunpack.c.h.b16 %v154
    %v193 = vunpack.c.l.b16 %v155
    %v194 = vunpack.c.h.b16 %v155
    %v195 = vunpack.c.l.b16 %v156
    %v196 = vunpack.c.h.b16 %v156
    %v197 = vunpack.c.l.b16 %v157
    %v198 = vunpack.c.h.b16 %v157
    %v199 = vunpack.c.l.b16 %v158
    %v200 = vunpack.c.h.b16 %v158
    %v201 = vunpack.c.l.b16 %v159
    %v202 = vunpack.c.h.b16 %v159
    %v203 = vunpack.c.l.b16 %v160
    %v204 = vunpack.c.h.b16 %v160
    %v205 = vunpack.c.l.b16 %v161
    %v206 = vunpack.c.h.b16 %v161
    %v207 = vunpack.c.l.b16 %v162
    %v208 = vunpack.c.h.b16 %v162
    %v209 = vunpack.c.l.b16 %v163
    %v210 = vunpack.c.h.b16 %v163
    %v211 = vunpack.c.l.b16 %v164
    %v212 = vunpack.c.h.b16 %v164
    %v213 = vpack.c.b16 %v183, %v181
    %v214 = vpack.c.b16 %v184, %v182
    %v215 = vpack.c.b16 %v187, %v185
    %v216 = vpack.c.b16 %v188, %v186
    %v217 = vpack.c.b16 %v191, %v189
    %v218 = vpack.c.b16 %v192, %v190
    %v219 = vpack.c.b16 %v195, %v193
    %v220 = vpack.c.b16 %v196, %v194
    %v221 = vpack.c.b16 %v199, %v197
    %v222 = vpack.c.b16 %v200, %v198
    %v223 = vpack.c.b16 %v203, %v201
    %v224 = vpack.c.b16 %v204, %v202
    %v225 = vpack.c.b16 %v207, %v205
    %v226 = vpack.c.b16 %v208, %v206
    %v227 = vpack.c.b16 %v211, %v209
    %v228 = vpack.c.b16 %v212, %v210
    %245 = vmatpush.bf16.msra.mxu0 %v227
    %246 = vmatpush.bf16.msra.mxu0 %v225
    %247 = vmatpush.bf16.msra.mxu0 %v223
    %248 = vmatpush.bf16.msra.mxu0 %v221
    %249 = vmatpush.bf16.msra.mxu0 %v219
    %250 = vmatpush.bf16.msra.mxu0 %v217
    %251 = vmatpush.bf16.msra.mxu0 %v215
    %252 = vmatpush.bf16.msra.mxu0 %v213
    %253 = vmatmul.bf16.gmra.mxu0 %v147
    %v254 = vpop.f32.mrf.mxu0
    %v255 = vadd.f32 0.0, %v254
    %v256 = vpop.f32.mrf.mxu0
    %v257 = vadd.f32 0.0, %v256
    %258 = vmatmul.bf16.gmra.mxu0 %v148
    %v259 = vpop.f32.mrf.mxu0
    %v260 = vadd.f32 0.0, %v259
    %v261 = vpop.f32.mrf.mxu0
    %v262 = vadd.f32 0.0, %v261
    %263 = vdwg.mxu0
    %264 = vmatpush.bf16.msra.mxu0 %v228
    %265 = vmatpush.bf16.msra.mxu0 %v226
    %266 = vmatpush.bf16.msra.mxu0 %v224
    %267 = vmatpush.bf16.msra.mxu0 %v222
    %268 = vmatpush.bf16.msra.mxu0 %v220
    %269 = vmatpush.bf16.msra.mxu0 %v218
    %270 = vmatpush.bf16.msra.mxu0 %v216
    %271 = vmatpush.bf16.msra.mxu0 %v214
    %272 = vmatmul.bf16.gmra.mxu0 %v147
    %v273 = vpop.f32.mrf.mxu0
    %v274 = vadd.f32 0.0, %v273
    %v275 = vpop.f32.mrf.mxu0
    %v276 = vadd.f32 0.0, %v275
    %277 = vmatmul.bf16.gmra.mxu0 %v148
    %v278 = vpop.f32.mrf.mxu0
    %v279 = vadd.f32 0.0, %v278
    %v280 = vpop.f32.mrf.mxu0
    %v281 = vadd.f32 0.0, %v280
    %282 = vdwg.mxu0
    %v283 = vld [vmem:[#allocation7] sm:$0xff]
    %v284 = vld [vmem:[#allocation7 + $0x8] sm:$0xff]
    %v285 = vld [vmem:[#allocation7 + $0x10] sm:$0xff]
    %v286 = vld [vmem:[#allocation7 + $0x18] sm:$0xff]
    %v287 = vmul.f32 %v283, %v255
    %v288 = vmul.f32 %v284, %v257
    %v289 = vmul.f32 %v285, %v260
    %v290 = vmul.f32 %v286, %v262
    %v291 = vld [vmem:[#allocation8] sm:$0xf]
    %v292 = vld [vmem:[#allocation8 + $0x4] sm:$0xf]
    %v293 = vld [vmem:[#allocation8 + $0x8] sm:$0xf]
    %v294 = vld [vmem:[#allocation8 + $0xc] sm:$0xf]
    %v295 = vpack.c.bf16 %v276, %v274
    %v296 = vpack.c.bf16 %v281, %v279
    %v301 = vunpack.c.l.b16 %v291
    %v302 = vunpack.c.l.b16 %v292
    %v303 = vunpack.c.l.b16 %v293
    %v304 = vunpack.c.l.b16 %v294
    %v305 = vpack.c.b16 %v302, %v301
    %v306 = vpack.c.b16 %v304, %v303
    %vm307 = vcmask 261120
    %v309 = vsel %vm307, %v305, 0
    %v312 = vsel %vm307, %v306, 0
    %314 = vmatpush.bf16.msra.mxu0 0
    %315 = vmatpush.bf16.msra.mxu0 0
    %316 = vmatpush.bf16.msra.mxu0 0
    %317 = vmatpush.bf16.msra.mxu0 0
    %318 = vmatpush.bf16.msra.mxu0 0
    %319 = vmatpush.bf16.msra.mxu0 0
    %320 = vmatpush.bf16.msra.mxu0 %v296
    %321 = vmatpush.bf16.msra.mxu0 %v295
    %322 = vmatmul.bf16.gmra.mxu0 %v309
    %v323 = vpop.f32.mrf.mxu0
    %v324 = vadd.f32 0.0, %v323
    %v325 = vpop.f32.mrf.mxu0
    %v326 = vadd.f32 0.0, %v325
    %327 = vmatmul.bf16.gmra.mxu0 %v312
    %v328 = vpop.f32.mrf.mxu0
    %v329 = vadd.f32 0.0, %v328
    %v330 = vpop.f32.mrf.mxu0
    %v331 = vadd.f32 0.0, %v330
    %332 = vdwg.mxu0
    %v333 = vadd.f32 %v287, %v324
    %v334 = vadd.f32 %v288, %v326
    %v335 = vadd.f32 %v289, %v329
    %v336 = vadd.f32 %v290, %v331
    %v337 = vld [vmem:[%s4] sm:$0x1]
    %v339 = vperm.slane %v337, 0
    %v341 = vadd.f32 %v333, %v339
    %v342 = vadd.f32 %v334, %v339
    %v343 = vadd.f32 %v335, %v339
    %v344 = vadd.f32 %v336, %v339
    %v345 = vmax.f32 %v341, 0.0
    %v346 = vmax.f32 %v342, 0.0
    %v347 = vmax.f32 %v343, 0.0
    %v348 = vmax.f32 %v344, 0.0
    %v349 = vpack.c.bf16 %v346, %v345
    %v350 = vpack.c.bf16 %v348, %v347
    %v351 = vld [vmem:[#allocation10] sm:$0xff]
    %v352 = vld [vmem:[#allocation10 + $0x8] sm:$0xff]
    %v353 = vld [vmem:[#allocation10 + $0x10] sm:$0xff]
    %v354 = vld [vmem:[#allocation10 + $0x18] sm:$0xff]
    %v355 = vld [vmem:[#allocation10 + $0x20] sm:$0xff]
    %v356 = vld [vmem:[#allocation10 + $0x28] sm:$0xff]
    %v357 = vld [vmem:[#allocation10 + $0x30] sm:$0xff]
    %v358 = vld [vmem:[#allocation10 + $0x38] sm:$0xff]
    %v359 = vld [vmem:[#allocation10 + $0x40] sm:$0xff]
    %v360 = vld [vmem:[#allocation10 + $0x48] sm:$0xff]
    %v361 = vld [vmem:[#allocation10 + $0x50] sm:$0xff]
    %v362 = vld [vmem:[#allocation10 + $0x58] sm:$0xff]
    %v363 = vld [vmem:[#allocation10 + $0x60] sm:$0xff]
    %v364 = vld [vmem:[#allocation10 + $0x68] sm:$0xff]
    %v365 = vld [vmem:[#allocation10 + $0x70] sm:$0xff]
    %v366 = vld [vmem:[#allocation10 + $0x78] sm:$0xff]
    %v383 = vunpack.c.l.b16 %v351
    %v384 = vunpack.c.h.b16 %v351
    %v385 = vunpack.c.l.b16 %v352
    %v386 = vunpack.c.h.b16 %v352
    %v387 = vunpack.c.l.b16 %v353
    %v388 = vunpack.c.h.b16 %v353
    %v389 = vunpack.c.l.b16 %v354
    %v390 = vunpack.c.h.b16 %v354
    %v391 = vunpack.c.l.b16 %v355
    %v392 = vunpack.c.h.b16 %v355
    %v393 = vunpack.c.l.b16 %v356
    %v394 = vunpack.c.h.b16 %v356
    %v395 = vunpack.c.l.b16 %v357
    %v396 = vunpack.c.h.b16 %v357
    %v397 = vunpack.c.l.b16 %v358
    %v398 = vunpack.c.h.b16 %v358
    %v399 = vunpack.c.l.b16 %v359
    %v400 = vunpack.c.h.b16 %v359
    %v401 = vunpack.c.l.b16 %v360
    %v402 = vunpack.c.h.b16 %v360
    %v403 = vunpack.c.l.b16 %v361
    %v404 = vunpack.c.h.b16 %v361
    %v405 = vunpack.c.l.b16 %v362
    %v406 = vunpack.c.h.b16 %v362
    %v407 = vunpack.c.l.b16 %v363
    %v408 = vunpack.c.h.b16 %v363
    %v409 = vunpack.c.l.b16 %v364
    %v410 = vunpack.c.h.b16 %v364
    %v411 = vunpack.c.l.b16 %v365
    %v412 = vunpack.c.h.b16 %v365
    %v413 = vunpack.c.l.b16 %v366
    %v414 = vunpack.c.h.b16 %v366
    %v415 = vpack.c.b16 %v385, %v383
    %v416 = vpack.c.b16 %v386, %v384
    %v417 = vpack.c.b16 %v389, %v387
    %v418 = vpack.c.b16 %v390, %v388
    %v419 = vpack.c.b16 %v393, %v391
    %v420 = vpack.c.b16 %v394, %v392
    %v421 = vpack.c.b16 %v397, %v395
    %v422 = vpack.c.b16 %v398, %v396
    %v423 = vpack.c.b16 %v401, %v399
    %v424 = vpack.c.b16 %v402, %v400
    %v425 = vpack.c.b16 %v405, %v403
    %v426 = vpack.c.b16 %v406, %v404
    %v427 = vpack.c.b16 %v409, %v407
    %v428 = vpack.c.b16 %v410, %v408
    %v429 = vpack.c.b16 %v413, %v411
    %v430 = vpack.c.b16 %v414, %v412
    %447 = vmatpush.bf16.msra.mxu0 %v429
    %448 = vmatpush.bf16.msra.mxu0 %v427
    %449 = vmatpush.bf16.msra.mxu0 %v425
    %450 = vmatpush.bf16.msra.mxu0 %v423
    %451 = vmatpush.bf16.msra.mxu0 %v421
    %452 = vmatpush.bf16.msra.mxu0 %v419
    %453 = vmatpush.bf16.msra.mxu0 %v417
    %454 = vmatpush.bf16.msra.mxu0 %v415
    %455 = vmatmul.bf16.gmra.mxu0 %v349
    %v456 = vpop.f32.mrf.mxu0
    %v457 = vadd.f32 0.0, %v456
    %v458 = vpop.f32.mrf.mxu0
    %v459 = vadd.f32 0.0, %v458
    %460 = vmatmul.bf16.gmra.mxu0 %v350
    %v461 = vpop.f32.mrf.mxu0
    %v462 = vadd.f32 0.0, %v461
    %v463 = vpop.f32.mrf.mxu0
    %v464 = vadd.f32 0.0, %v463
    %465 = vdwg.mxu0
    %466 = vmatpush.bf16.msra.mxu0 %v430
    %467 = vmatpush.bf16.msra.mxu0 %v428
    %468 = vmatpush.bf16.msra.mxu0 %v426
    %469 = vmatpush.bf16.msra.mxu0 %v424
    %470 = vmatpush.bf16.msra.mxu0 %v422
    %471 = vmatpush.bf16.msra.mxu0 %v420
    %472 = vmatpush.bf16.msra.mxu0 %v418
    %473 = vmatpush.bf16.msra.mxu0 %v416
    %474 = vmatmul.bf16.gmra.mxu0 %v349
    %v475 = vpop.f32.mrf.mxu0
    %v476 = vadd.f32 0.0, %v475
    %v477 = vpop.f32.mrf.mxu0
    %v478 = vadd.f32 0.0, %v477
    %479 = vmatmul.bf16.gmra.mxu0 %v350
    %v480 = vpop.f32.mrf.mxu0
    %v481 = vadd.f32 0.0, %v480
    %v482 = vpop.f32.mrf.mxu0
    %v483 = vadd.f32 0.0, %v482
    %484 = vdwg.mxu0
    %v485 = vld [vmem:[#allocation11] sm:$0xff]
    %v486 = vld [vmem:[#allocation11 + $0x8] sm:$0xff]
    %v487 = vld [vmem:[#allocation11 + $0x10] sm:$0xff]
    %v488 = vld [vmem:[#allocation11 + $0x18] sm:$0xff]
    %v489 = vmul.f32 %v485, %v457
    %v490 = vmul.f32 %v486, %v459
    %v491 = vmul.f32 %v487, %v462
    %v492 = vmul.f32 %v488, %v464
    %v493 = vld [vmem:[#allocation13] sm:$0xf]
    %v494 = vld [vmem:[#allocation13 + $0x4] sm:$0xf]
    %v495 = vld [vmem:[#allocation13 + $0x8] sm:$0xf]
    %v496 = vld [vmem:[#allocation13 + $0xc] sm:$0xf]
    %v497 = vpack.c.bf16 %v478, %v476
    %v498 = vpack.c.bf16 %v483, %v481
    %v503 = vunpack.c.l.b16 %v493
    %v504 = vunpack.c.l.b16 %v494
    %v505 = vunpack.c.l.b16 %v495
    %v506 = vunpack.c.l.b16 %v496
    %v507 = vpack.c.b16 %v504, %v503
    %v508 = vpack.c.b16 %v506, %v505
    %v510 = vsel %vm307, %v507, 0
    %v513 = vsel %vm307, %v508, 0
    %515 = vmatpush.bf16.msra.mxu0 0
    %516 = vmatpush.bf16.msra.mxu0 0
    %517 = vmatpush.bf16.msra.mxu0 0
    %518 = vmatpush.bf16.msra.mxu0 0
    %519 = vmatpush.bf16.msra.mxu0 0
    %520 = vmatpush.bf16.msra.mxu0 0
    %521 = vmatpush.bf16.msra.mxu0 %v498
    %522 = vmatpush.bf16.msra.mxu0 %v497
    %523 = vmatmul.bf16.gmra.mxu0 %v510
    %v524 = vpop.f32.mrf.mxu0
    %v525 = vadd.f32 0.0, %v524
    %v526 = vpop.f32.mrf.mxu0
    %v527 = vadd.f32 0.0, %v526
    %528 = vmatmul.bf16.gmra.mxu0 %v513
    %v529 = vpop.f32.mrf.mxu0
    %v530 = vadd.f32 0.0, %v529
    %v531 = vpop.f32.mrf.mxu0
    %v532 = vadd.f32 0.0, %v531
    %533 = vdwg.mxu0
    %v534 = vadd.f32 %v489, %v525
    %v535 = vadd.f32 %v490, %v527
    %v536 = vadd.f32 %v491, %v530
    %v537 = vadd.f32 %v492, %v532
    %v538 = vld [vmem:[%s8] sm:$0x1]
    %v540 = vperm.slane %v538, 0
    %v542 = vadd.f32 %v534, %v540
    %v543 = vadd.f32 %v535, %v540
    %v544 = vadd.f32 %v536, %v540
    %v545 = vadd.f32 %v537, %v540
    %v546 = vmax.f32 %v542, 0.0
    %v547 = vmax.f32 %v543, 0.0
    %v548 = vmax.f32 %v544, 0.0
    %v549 = vmax.f32 %v545, 0.0
    %v550 = vadd.f32 %v143, %v546
    %v551 = vadd.f32 %v144, %v547
    %v552 = vadd.f32 %v145, %v548
    %v553 = vadd.f32 %v146, %v549
    %554 = vst [vmem:[#allocation14] sm:$0xff] %v550
    %555 = vst [vmem:[#allocation14 + $0x8] sm:$0xff] %v551
    %556 = vst [vmem:[#allocation14 + $0x10] sm:$0xff] %v552
    %557 = vst [vmem:[#allocation14 + $0x18] sm:$0xff] %v553
    // Predicated region
    $region66: #{tpu_custom_call.1} parent=1 // pred_check
      _
    $region67: #{tpu_custom_call.1} parent=1 // pred_check_branch
      %559 = sbr.rel (0) target = $region69
    $region68: #{tpu_custom_call.1} parent=1 // pred_region
      %561 = vsyncadd [#allocation4], 0
      %s562 = sshll.u32 [#allocation14], 4
      %s563 = int_to_ptr.vmem [resolvable:$true] %s562
      %s564 = sshll.u32 %s9, 4
      %s565 = int_to_ptr.hbm [resolvable:$true] %s564
      %570 = dma.vmem_to_hbm [thread:$0]  %s563, 512, %s565, [#allocation4], 128, 128, 8
    $region69: #{tpu_custom_call.1} parent=1 // pred_fallthru
      _
    // Predicated region
    $region70: #{tpu_custom_call.1} parent=1 // pred_check
      _
    $region71: #{tpu_custom_call.1} parent=1 // pred_check_branch
      %572 = sbr.rel (0) target = $region73
    $region72: #{tpu_custom_call.1} parent=1 // pred_region
      %574 = dma.done [#allocation4], 512
    $region73: #{tpu_custom_call.1} parent=1 // pred_fallthru
      _
    %575 = vsyncpa [#allocation3], 1
    %576 = vsyncpa [#allocation6], 1
    %577 = vsyncpa [#allocation9], 1
    %578 = vsyncpa [#allocation12], 1
    %579 = vsyncpa [#allocation4], 1

</llo_original>
